<compile_context>
chip_gen: v6e
topology: v6e:2x2x1
jax: 0.10.0
libtpu: 0.0.40
codegen_flags: <defaults>
</compile_context>

<pallas_src>
import jax
import jax.numpy as jnp
from jax.experimental import pallas as pl
from jax.experimental.pallas import tpu as pltpu

_SUBLANE = 8


def _vmem_capacity_bytes():
    """Physical VMEM per TensorCore (v5e/v6e: 128 MiB, v7x: 64 MiB)."""
    try:
        info = pltpu.get_tpu_info()
        cap = getattr(info, "vmem_capacity_bytes", None)
        if cap:
            return int(cap)
    except Exception:
        pass
    return 64 * 1024 * 1024  # conservative fallback (v7x per-TC)


def _tokenizer_kernel(x_ref, w_ref, b_ref, o_ref):
    """One batch tile:  out[b, f, :] = x[b, f] * W[f, :] + B[f, :].

    x_ref: (bm, F) f32   w_ref/b_ref: (F, D) f32   o_ref: (bm, F, D) out_dtype
    Single full-block store (no split at the num/cat feature boundary).
    """
    x = x_ref[...]
    o_ref[...] = (x[:, :, None] * w_ref[...][None, :, :]
                  + b_ref[...][None, :, :]).astype(o_ref.dtype)


def tabular_linear_embedding(x_num, x_cat, w_num, b_num, w_cat, b_cat, *,
                             block_b=None, out_dtype=jnp.float32):
    """Pallas feature tokenizer.

    x_num: (B, n_num) float or None; x_cat: (B, n_cat) int or None.
    Returns (B, n_num + n_cat, d_token) in `out_dtype`.
    """
    assert x_num is not None or x_cat is not None, "need at least one modality"

    # Pre-concatenate in the wrapper (touches only B*F and F*D elements — ~1/D of the
    # output traffic) so the kernel does a single unmasked full-block store.
    xs, ws, bs = [], [], []
    if x_num is not None:
        xs.append(x_num.astype(jnp.float32))
        ws.append(w_num.astype(jnp.float32))
        bs.append(b_num.astype(jnp.float32))
    if x_cat is not None:
        xs.append(x_cat.astype(jnp.float32))  # int->f32 exact for cardinalities < 2^24
        ws.append(w_cat.astype(jnp.float32))
        bs.append(b_cat.astype(jnp.float32))
    x_full = xs[0] if len(xs) == 1 else jnp.concatenate(xs, axis=1)
    w_full = ws[0] if len(ws) == 1 else jnp.concatenate(ws, axis=0)
    b_full = bs[0] if len(bs) == 1 else jnp.concatenate(bs, axis=0)

    B, F = x_full.shape
    D = w_full.shape[1]
    out_itemsize = jnp.dtype(out_dtype).itemsize

    # Generation-aware batch-tile sizing: large enough to amortize ~0.35us/step, small
    # enough that double-buffered blocks + resident weights fit the per-generation VMEM.
    vmem_cap = _vmem_capacity_bytes()
    budget = vmem_cap // 2
    if block_b is None:
        resident = 2 * 2 * F * D * 4                        # w + b (double-buffered)
        per_row = 2 * F * D * out_itemsize + 2 * F * 4      # out block + x block (x2 bufs)
        block_b = max(_SUBLANE, (budget - resident) // per_row)
        block_b = min(block_b, 1024)
    block_b = int(block_b)

    if block_b >= B:
        block_b = B                                   # whole array: block == full dim is legal
    else:
        block_b = max(_SUBLANE, (block_b // _SUBLANE) * _SUBLANE)
        if block_b >= B:
            block_b = B

    grid = (pl.cdiv(B, block_b),)                     # ragged last block masked by Pallas

    vmem_limit = int(min(vmem_cap - (8 << 20), budget + (8 << 20)))

    cost = pl.CostEstimate(
        flops=2 * B * F * D,
        transcendentals=0,
        bytes_accessed=B * F * D * out_itemsize + B * F * 4 + 2 * F * D * 4,
    )

    # TODO(synk): add a second grid axis over d_token for configs where the resident
    # (F, D) weights/biases exceed the per-generation VMEM budget (very large F*D).
    out = pl.pallas_call(
        _tokenizer_kernel,
        out_shape=jax.ShapeDtypeStruct((B, F, D), out_dtype),
        grid=grid,
        in_specs=[
            pl.BlockSpec((block_b, F), lambda i: (i, 0)),
            # Constant block index across the grid -> weights/biases stay resident in VMEM.
            pl.BlockSpec((F, D), lambda i: (0, 0)),
            pl.BlockSpec((F, D), lambda i: (0, 0)),
        ],
        out_specs=pl.BlockSpec((block_b, F, D), lambda i: (i, 0, 0)),
        compiler_params=pltpu.CompilerParams(
            dimension_semantics=("parallel",),        # shard batch tiles across TCs (v7x)
            vmem_limit_bytes=vmem_limit,
        ),
        cost_estimate=cost,
    )(x_full, w_full, b_full)

    return out


def _init_linear_embeddings(key, n_features, d_token):
    """Matches rtdl LinearEmbeddings init: U(-d^-0.5, d^-0.5) for weight and bias."""
    d_rsqrt = d_token ** -0.5
    kw, kb = jax.random.split(key)
    w = jax.random.uniform(kw, (n_features, d_token), jnp.float32, -d_rsqrt, d_rsqrt)
    b = jax.random.uniform(kb, (n_features, d_token), jnp.float32, -d_rsqrt, d_rsqrt)
    return w, b


def _reference(x_num, x_cat, w_num, b_num, w_cat, b_cat):
    parts = []
    if x_num is not None:
        parts.append(x_num[:, :, None] * w_num[None] + b_num[None])
    if x_cat is not None:
        parts.append(x_cat.astype(jnp.float32)[:, :, None] * w_cat[None] + b_cat[None])
    return parts[0] if len(parts) == 1 else jnp.concatenate(parts, axis=1)


if __name__ == "__main__":
    key = jax.random.PRNGKey(0)
    k_xnum, k_xcat, k_num, k_cat, k2 = jax.random.split(key, 5)

    # --- Test 1: the module docstring shapes (single grid step) --------------------
    batch, n_num_features, cat_cardinalities, d_token = 8, 3, [2, 3], 7
    n_cat_features = len(cat_cardinalities)

    x_num = jax.random.normal(k_xnum, (batch, n_num_features), jnp.float32)
    x_cat = jnp.stack(
        [jax.random.randint(jax.random.fold_in(k_xcat, i), (batch,), 0, card)
         for i, card in enumerate(cat_cardinalities)],
        axis=1,
    ).astype(jnp.int32)
    w_num, b_num = _init_linear_embeddings(k_num, n_num_features, d_token)
    w_cat, b_cat = _init_linear_embeddings(k_cat, n_cat_features, d_token)

    tokens = jax.block_until_ready(
        tabular_linear_embedding(x_num, x_cat, w_num, b_num, w_cat, b_cat))
    ref = _reference(x_num, x_cat, w_num, b_num, w_cat, b_cat)
    assert tokens.shape == (batch, n_num_features + n_cat_features, d_token)
    assert jnp.allclose(tokens, ref, atol=1e-6, rtol=1e-6)

    # --- Test 2: multi-step batch grid with a ragged final block -------------------
    B2, n_num2, cards2, d2 = 300, 6, [3, 5, 7, 11], 32
    kx1, kx2, kp1, kp2 = jax.random.split(k2, 4)
    x_num2 = jax.random.normal(kx1, (B2, n_num2), jnp.float32)
    x_cat2 = jnp.stack(
        [jax.random.randint(jax.random.fold_in(kx2, i), (B2,), 0, c)
         for i, c in enumerate(cards2)],
        axis=1,
    ).astype(jnp.int32)
    w_num2, b_num2 = _init_linear_embeddings(kp1, n_num2, d2)
    w_cat2, b_cat2 = _init_linear_embeddings(kp2, len(cards2), d2)

    tokens2 = jax.block_until_ready(
        tabular_linear_embedding(x_num2, x_cat2, w_num2, b_num2, w_cat2, b_cat2,
                                 block_b=64))
    ref2 = _reference(x_num2, x_cat2, w_num2, b_num2, w_cat2, b_cat2)
    assert tokens2.shape == (B2, n_num2 + len(cards2), d2)
    assert jnp.allclose(tokens2, ref2, atol=1e-5, rtol=1e-5)

    # --- Test 3: numerical-only path + bf16 output mode ----------------------------
    tokens3 = jax.block_until_ready(
        tabular_linear_embedding(x_num2, None, w_num2, b_num2, None, None,
                                 out_dtype=jnp.bfloat16))
    ref3 = _reference(x_num2, None, w_num2, b_num2, None, None)
    assert tokens3.shape == (B2, n_num2, d2) and tokens3.dtype == jnp.bfloat16
    assert jnp.allclose(tokens3.astype(jnp.float32), ref3, atol=3e-2, rtol=3e-2)

    print("KERNEL_OK")
</pallas_src>

<mosaic_0001>
module attributes {stable_mosaic.version = 11 : i64} {
  func.func @_tokenizer_kernel(%arg0: i32, %arg1: memref<8x5xf32, #tpu.memory_space<vmem>>, %arg2: memref<5x7xf32, #tpu.memory_space<vmem>>, %arg3: memref<5x7xf32, #tpu.memory_space<vmem>>, %arg4: memref<8x5x7xf32, #tpu.memory_space<vmem>>) attributes {dimension_semantics = [#tpu.dimension_semantics<parallel>], iteration_bounds = array<i64: 1>, scalar_prefetch = 0 : i64, scratch_operands = 0 : i64, tpu.core_type = #tpu.core_type<tc>, window_params = [{transform_indices = @transform_0, window_bounds = array<i64: 8, 5>}, {pipeline_mode = #tpu.pipeline_mode<synchronous>, transform_indices = @transform_1, window_bounds = array<i64: 5, 7>}, {pipeline_mode = #tpu.pipeline_mode<synchronous>, transform_indices = @transform_2, window_bounds = array<i64: 5, 7>}, {transform_indices = @transform_3, window_bounds = array<i64: 8, 5, 7>}]} {
    %c0 = arith.constant 0 : index
    %c0_0 = arith.constant 0 : index
    %0 = vector.load %arg1[%c0, %c0_0] : memref<8x5xf32, #tpu.memory_space<vmem>>, vector<8x5xf32>
    %1 = vector.shape_cast %0 : vector<8x5xf32> to vector<8x5x1xf32>
    %c0_1 = arith.constant 0 : index
    %c0_2 = arith.constant 0 : index
    %2 = vector.load %arg2[%c0_1, %c0_2] : memref<5x7xf32, #tpu.memory_space<vmem>>, vector<5x7xf32>
    %3 = vector.shape_cast %2 : vector<5x7xf32> to vector<1x5x7xf32>
    %4 = vector.broadcast %1 : vector<8x5x1xf32> to vector<8x5x7xf32>
    %5 = vector.broadcast %3 : vector<1x5x7xf32> to vector<8x5x7xf32>
    %6 = arith.mulf %4, %5 : vector<8x5x7xf32>
    %c0_3 = arith.constant 0 : index
    %c0_4 = arith.constant 0 : index
    %7 = vector.load %arg3[%c0_3, %c0_4] : memref<5x7xf32, #tpu.memory_space<vmem>>, vector<5x7xf32>
    %8 = vector.shape_cast %7 : vector<5x7xf32> to vector<1x5x7xf32>
    %9 = vector.broadcast %8 : vector<1x5x7xf32> to vector<8x5x7xf32>
    %10 = arith.addf %6, %9 : vector<8x5x7xf32>
    %c0_5 = arith.constant 0 : index
    %c0_6 = arith.constant 0 : index
    %c0_7 = arith.constant 0 : index
    %11 = vector.load %arg4[%c0_5, %c0_6, %c0_7] : memref<8x5x7xf32, #tpu.memory_space<vmem>>, vector<8x5x7xf32>
    tpu.vector_store %arg4[%c0_5, %c0_6, %c0_7], %10 {strides = array<i32>} : memref<8x5x7xf32, #tpu.memory_space<vmem>>, vector<8x5x7xf32>,
    return
  }
  func.func @transform_0(%arg0: i32) -> (i32, i32) {
    %c0_i32 = arith.constant 0 : i32
    %c0_i32_0 = arith.constant 0 : i32
    return %arg0, %c0_i32 : i32, i32
  }
  func.func @transform_1(%arg0: i32) -> (i32, i32) {
    %c0_i32 = arith.constant 0 : i32
    %c0_i32_0 = arith.constant 0 : i32
    %c0_i32_1 = arith.constant 0 : i32
    return %c0_i32, %c0_i32_0 : i32, i32
  }
  func.func @transform_2(%arg0: i32) -> (i32, i32) {
    %c0_i32 = arith.constant 0 : i32
    %c0_i32_0 = arith.constant 0 : i32
    %c0_i32_1 = arith.constant 0 : i32
    return %c0_i32, %c0_i32_0 : i32, i32
  }
  func.func @transform_3(%arg0: i32) -> (i32, i32, i32) {
    %c0_i32 = arith.constant 0 : i32
    %c0_i32_0 = arith.constant 0 : i32
    %c0_i32_1 = arith.constant 0 : i32
    return %arg0, %c0_i32, %c0_i32_0 : i32, i32, i32
  }
}

</mosaic_0001>

<llo_original>
// kernel: tpu_custom_call.1
$region0: #{tpu_custom_call.1}
  #allocation0 [shape = 'u32[]', space=smem, size = 0x4, offset = 0x4, fixed_abs, tag = 'smem constant byte address 0x4 - core index']
  #allocation1 [shape = 'u32[144,128]{1,0:T(1,128)}', space=vmem, size = 0x12000, scoped, tag = 'internal scratch']
  %s0 = inlined_call_operand.hbm [shape: f32[8,5], index: 0, kind: input, shape index: {}]
  %s1 = inlined_call_operand.hbm [shape: f32[5,7], index: 1, kind: input, shape index: {}]
  %s2 = inlined_call_operand.hbm [shape: f32[5,7], index: 2, kind: input, shape index: {}]
  %s3 = inlined_call_operand.vmem [shape: f32[8,5,7], index: 3, kind: output, shape index: {}]
  %s4 = sld [smem:[#allocation0]]
  $region34: #{tpu_custom_call.1} parent=0
    _
  %s6 = ssub.s32 1, %s4
  %s7 = scalar_select 0, %s6, %s4
  $region1: #{tpu_custom_call.1} parent=0
    #allocation2 [shape = 'u8[4096]{0}', space=vmem, size = 0x1000, scoped, tag = 'input window, operand 0, single buffered']
    #allocation3 [shape = 's32[1]{0}', space=sflag, size = 0x4, scoped, tag = 'scoped memory for tpu_custom_call.1']
    #allocation4 [shape = 'u8[4096]{0}', space=vmem, size = 0x1000, scoped, tag = 'input window, operand 1, single buffered']
    #allocation5 [shape = 's32[1]{0}', space=sflag, size = 0x4, scoped, tag = 'scoped memory for tpu_custom_call.1']
    #allocation6 [shape = 'u8[4096]{0}', space=vmem, size = 0x1000, scoped, tag = 'input window, operand 2, single buffered']
    %8 = vsyncpa [#allocation3], 0
    %9 = vsyncpa [#allocation5], 0
    // Predicated region
    $region2: #{tpu_custom_call.1} parent=1 // pred_check
      _
    $region3: #{tpu_custom_call.1} parent=1 // pred_check_branch
      %11 = sbr.rel (0) target = $region5
    $region4: #{tpu_custom_call.1} parent=1 // pred_region
      %s13 = ssub.s32 128, 128
      %14 = vsyncadd [#allocation3], %s13
      %s16 = sshll.u32 [#allocation2], 4
      %s17 = int_to_ptr.vmem [resolvable:$true] %s16
      %19 = dma.hbm_to_vmem [thread:$0]  %s0, 128, %s17, [#allocation3]
    $region5: #{tpu_custom_call.1} parent=1 // pred_fallthru
      _
    // Predicated region
    $region6: #{tpu_custom_call.1} parent=1 // pred_check
      _
    $region7: #{tpu_custom_call.1} parent=1 // pred_check_branch
      %21 = sbr.rel (0) target = $region9
    $region8: #{tpu_custom_call.1} parent=1 // pred_region
      %s23 = ssub.s32 128, 128
      %24 = vsyncadd [#allocation5], %s23
      %s26 = sshll.u32 [#allocation4], 4
      %s27 = int_to_ptr.vmem [resolvable:$true] %s26
      %29 = dma.hbm_to_vmem [thread:$0]  %s1, 128, %s27, [#allocation5]
    $region9: #{tpu_custom_call.1} parent=1 // pred_fallthru
      _
    // Predicated region
    $region10: #{tpu_custom_call.1} parent=1 // pred_check
      _
    $region11: #{tpu_custom_call.1} parent=1 // pred_check_branch
      %31 = sbr.rel (0) target = $region13
    $region12: #{tpu_custom_call.1} parent=1 // pred_region
      %s33 = ssub.s32 128, 128
      %34 = vsyncadd [#allocation5], %s33
      %s36 = sshll.u32 [#allocation6], 4
      %s37 = int_to_ptr.vmem [resolvable:$true] %s36
      %39 = dma.hbm_to_vmem [thread:$0]  %s2, 128, %s37, [#allocation5]
    $region13: #{tpu_custom_call.1} parent=1 // pred_fallthru
      _
    // Predicated region
    $region14: #{tpu_custom_call.1} parent=1 // pred_check
      _
    $region15: #{tpu_custom_call.1} parent=1 // pred_check_branch
      %41 = sbr.rel (0) target = $region17
    $region16: #{tpu_custom_call.1} parent=1 // pred_region
      %42 = dma.done [#allocation3], 128
    $region17: #{tpu_custom_call.1} parent=1 // pred_fallthru
      _
    // Predicated region
    $region18: #{tpu_custom_call.1} parent=1 // pred_check
      _
    $region19: #{tpu_custom_call.1} parent=1 // pred_check_branch
      %44 = sbr.rel (0) target = $region21
    $region20: #{tpu_custom_call.1} parent=1 // pred_region
      %45 = dma.done [#allocation5], 128
    $region21: #{tpu_custom_call.1} parent=1 // pred_fallthru
      _
    // Predicated region
    $region22: #{tpu_custom_call.1} parent=1 // pred_check
      _
    $region23: #{tpu_custom_call.1} parent=1 // pred_check_branch
      %47 = sbr.rel (0) target = $region25
    $region24: #{tpu_custom_call.1} parent=1 // pred_region
      %48 = dma.done [#allocation5], 128
    $region25: #{tpu_custom_call.1} parent=1 // pred_fallthru
      _
    %v49 = vld [vmem:[#allocation2] sm:$0xff]
    %v50 = vlaneseq
    %v51 = vshrl.u32 %v50, 7
    %v52 = vsub.s32 0, %v51
    %v53 = vrot.slane %v49, %v52
    %55 = vbcast.lane.b32.xlu0 %v53, 256
    %v56 = vpop.permute.xlu0 %55
    %v57 = vlaneseq
    %v58 = vshrl.u32 %v57, 7
    %v59 = vsub.s32 1, %v58
    %v60 = vrot.slane %v49, %v59
    %62 = vbcast.lane.b32.xlu0 %v60, 256
    %v63 = vpop.permute.xlu0 %62
    %v64 = vlaneseq
    %v65 = vshrl.u32 %v64, 7
    %v66 = vsub.s32 2, %v65
    %v67 = vrot.slane %v49, %v66
    %69 = vbcast.lane.b32.xlu0 %v67, 256
    %v70 = vpop.permute.xlu0 %69
    %v71 = vlaneseq
    %v72 = vshrl.u32 %v71, 7
    %v73 = vsub.s32 3, %v72
    %v74 = vrot.slane %v49, %v73
    %76 = vbcast.lane.b32.xlu0 %v74, 256
    %v77 = vpop.permute.xlu0 %76
    %v78 = vlaneseq
    %v79 = vshrl.u32 %v78, 7
    %v80 = vsub.s32 4, %v79
    %v81 = vrot.slane %v49, %v80
    %83 = vbcast.lane.b32.xlu0 %v81, 256
    %v84 = vpop.permute.xlu0 %83
    %v85 = vlaneseq
    %v86 = vshrl.u32 %v85, 7
    %v87 = vsub.s32 5, %v86
    %v88 = vrot.slane %v49, %v87
    %90 = vbcast.lane.b32.xlu0 %v88, 256
    %v91 = vpop.permute.xlu0 %90
    %v92 = vlaneseq
    %v93 = vshrl.u32 %v92, 7
    %v94 = vsub.s32 6, %v93
    %v95 = vrot.slane %v49, %v94
    %97 = vbcast.lane.b32.xlu0 %v95, 256
    %v98 = vpop.permute.xlu0 %97
    %v99 = vlaneseq
    %v100 = vshrl.u32 %v99, 7
    %v101 = vsub.s32 7, %v100
    %v102 = vrot.slane %v49, %v101
    %104 = vbcast.lane.b32.xlu0 %v102, 256
    %v105 = vpop.permute.xlu0 %104
    %v106 = vld [vmem:[#allocation4] sm:$0x1f]
    %v107 = vmul.f32 %v56, %v106
    %v108 = vmul.f32 %v63, %v106
    %v109 = vmul.f32 %v70, %v106
    %v110 = vmul.f32 %v77, %v106
    %v111 = vmul.f32 %v84, %v106
    %v112 = vmul.f32 %v91, %v106
    %v113 = vmul.f32 %v98, %v106
    %v114 = vmul.f32 %v105, %v106
    %v115 = vld [vmem:[#allocation6] sm:$0x1f]
    %v116 = vadd.f32 %v107, %v115
    %v117 = vadd.f32 %v108, %v115
    %v118 = vadd.f32 %v109, %v115
    %v119 = vadd.f32 %v110, %v115
    %v120 = vadd.f32 %v111, %v115
    %v121 = vadd.f32 %v112, %v115
    %v122 = vadd.f32 %v113, %v115
    %v123 = vadd.f32 %v114, %v115
    %vm124 = vcmask 53248
    %125 = vst.msk [vmem:[%s3] sm:$0x1f] %vm124, %v116
    %126 = vst.msk [vmem:[%s3 + $0x8] sm:$0x1f] %vm124, %v117
    %127 = vst.msk [vmem:[%s3 + $0x10] sm:$0x1f] %vm124, %v118
    %128 = vst.msk [vmem:[%s3 + $0x18] sm:$0x1f] %vm124, %v119
    %129 = vst.msk [vmem:[%s3 + $0x20] sm:$0x1f] %vm124, %v120
    %130 = vst.msk [vmem:[%s3 + $0x28] sm:$0x1f] %vm124, %v121
    %131 = vst.msk [vmem:[%s3 + $0x30] sm:$0x1f] %vm124, %v122
    %132 = vst.msk [vmem:[%s3 + $0x38] sm:$0x1f] %vm124, %v123
    // Predicated region
    $region26: #{tpu_custom_call.1} parent=1 // pred_check
      _
    $region27: #{tpu_custom_call.1} parent=1 // pred_check_branch
      %134 = sbr.rel (0) target = $region29
    $region28: #{tpu_custom_call.1} parent=1 // pred_region
      _
    $region29: #{tpu_custom_call.1} parent=1 // pred_fallthru
      _
    // Predicated region
    $region30: #{tpu_custom_call.1} parent=1 // pred_check
      _
    $region31: #{tpu_custom_call.1} parent=1 // pred_check_branch
      %136 = sbr.rel (0) target = $region33
    $region32: #{tpu_custom_call.1} parent=1 // pred_region
      _
    $region33: #{tpu_custom_call.1} parent=1 // pred_fallthru
      _
    %137 = vsyncpa [#allocation3], 1
    %138 = vsyncpa [#allocation5], 1

</llo_original>
